<compile_context>
chip_gen: v7x
topology: tpu7x:2x2x1
jax: 0.10.0
libtpu: 0.0.40
codegen_flags: <defaults>
</compile_context>

<pallas_src>
import jax
import jax.numpy as jnp
from jax.experimental import pallas as pl
from jax.experimental.pallas import tpu as pltpu


def _vmem_budget_bytes():
    """Generation-aware VMEM request ceiling (leaves compiler headroom)."""
    cap = None
    try:
        info = pltpu.get_tpu_info()
        for name in ("vmem_capacity_bytes", "vmem_bytes", "vmem_size_bytes"):
            val = getattr(info, name, None)
            if val:
                cap = int(val)
                break
    except Exception:
        cap = None
    if not cap:
        cap = 64 << 20  # conservative fallback: assume v7x-sized VMEM
    # ~85% of physical and never closer than 8 MiB to the cap:
    #   v7x (64 MiB)  -> ~54 MiB;   v5e/v6e (128 MiB) -> ~109 MiB.
    return max(min(int(cap * 0.85), cap - (8 << 20)), 16 << 20)


def _residual_linear_kernel(xm_ref, w_ref, b_ref, xr_ref, o_ref):
    # xm_ref: (TM, D)  MXU-dtype activations (full K)
    # w_ref : (D, TN)  MXU-dtype weight N-tile (pre-transposed: D_in x D_out)
    # b_ref : (1, TN)  f32 bias N-tile
    # xr_ref: (TM, TN) original-precision residual tile (lane-dense)
    # o_ref : (TM, TN)
    y = jnp.dot(xm_ref[...], w_ref[...], preferred_element_type=jnp.float32)
    y = y + b_ref[...].astype(jnp.float32) + xr_ref[...].astype(jnp.float32)
    o_ref[...] = y.astype(o_ref.dtype)


def naive_residual_linear(x, w_t, b, *, tile_m=256, mxu_dtype=jnp.bfloat16):
    """Fused  out = x @ w_t + b + x   (== NaiveResidual(Linear).forward(x)).

    x   : (B, S, D)  activations.
    w_t : (D, D)     Linear weight ALREADY transposed to (D_in, D_out).
                     torch stores (D_out, D_in); transpose ONCE at init time.
    b   : (D,)       bias.
    mxu_dtype : dtype for the MXU operands (default bf16 — native MXU dtype on
                v5e/v6e/v7x). Accumulation, bias and residual stay f32.
                Pass None to keep f32 operands.
    """
    B, S, D = x.shape
    assert w_t.shape == (D, D) and b.shape == (D,)
    M = B * S
    x2 = x.reshape(M, D)

    # Hoisted operand casts (once in the wrapper, not per grid point).
    if mxu_dtype is None or x2.dtype == mxu_dtype:
        x_mxu = x2
    else:
        x_mxu = x2.astype(mxu_dtype)
    if mxu_dtype is None or w_t.dtype == mxu_dtype:
        w_k = w_t
    else:
        w_k = w_t.astype(mxu_dtype)
    b2 = b.reshape(1, D).astype(jnp.float32)

    out_dtype = x.dtype
    itm = x_mxu.dtype.itemsize   # MXU activation bytes/elt
    itw = w_k.dtype.itemsize     # weight bytes/elt
    itr = x2.dtype.itemsize      # residual bytes/elt
    ito = jnp.dtype(out_dtype).itemsize

    # ---- M tiling: full-row block for small M (always a legal block shape),
    #      else a sublane-aligned tile; ragged tails -> Pallas masked edge
    #      blocks (no jnp.pad / slice round trip). ----
    sub = 16 if min(itm, itw, itr, ito) == 2 else 8
    if M <= tile_m:
        tm = M
    else:
        tm = max(sub, (tile_m // sub) * sub)

    # ---- N tiling: keep the whole weight VMEM-resident whenever the
    #      double-buffered schedule fits the generation-aware budget (weight
    #      then read from HBM exactly once, regardless of M); otherwise
    #      stream 128-aligned N tiles of the weight. ----
    budget = _vmem_budget_bytes()

    def blocks_bytes(tm_, tn_):
        # Every block conservatively counted as double-buffered.
        return 2 * (tm_ * D * itm        # x_mxu block (full K)
                    + D * tn_ * itw      # weight N-tile
                    + tn_ * 4            # bias N-tile
                    + tm_ * tn_ * itr    # residual tile
                    + tm_ * tn_ * ito)   # output tile

    def fits(tm_, tn_):
        return blocks_bytes(tm_, tn_) <= int(budget * 0.9)

    if fits(tm, D) or D % 128 != 0:
        # TODO(synk): for very large D that is not 128-aligned, pad D_out to a
        # multiple of 128 (and slice the output) instead of forcing tn = D.
        tn = D
    else:
        tn = 512 if D % 512 == 0 else 256 if D % 256 == 0 else 128
        while tn > 128 and not fits(tm, tn):
            tn //= 2
        # Larger M tiles halve weight re-streaming in the N-tiled regime.
        while tm < 512 and M >= 2 * tm and fits(2 * tm, tn):
            tm *= 2

    gm = pl.cdiv(M, tm)
    gn = pl.cdiv(D, tn)

    vmem_limit = int(min(max(blocks_bytes(tm, tn) + (2 << 20), 16 << 20), budget))

    # x_mxu is DMA'd once per M tile (its block index is constant across the
    # inner j axis); the weight is DMA'd once if resident, else once per M tile.
    w_passes = 1 if tn == D else gm
    cost = pl.CostEstimate(
        flops=2 * M * D * D + 2 * M * D,
        transcendentals=0,
        bytes_accessed=int(M * D * itm
                           + M * D * itr
                           + D * D * itw * w_passes
                           + D * 4 * w_passes
                           + M * D * ito),
    )

    out2 = pl.pallas_call(
        _residual_linear_kernel,
        out_shape=jax.ShapeDtypeStruct((M, D), out_dtype),
        grid_spec=pltpu.PrefetchScalarGridSpec(
            num_scalar_prefetch=0,
            grid=(gm, gn),
            in_specs=[
                pl.BlockSpec((tm, D), lambda i, j: (i, 0)),    # MXU activations
                pl.BlockSpec((D, tn), lambda i, j: (0, j)),    # weight N-tile
                pl.BlockSpec((1, tn), lambda i, j: (0, j)),    # bias N-tile
                pl.BlockSpec((tm, tn), lambda i, j: (i, j)),   # residual tile
            ],
            out_specs=pl.BlockSpec((tm, tn), lambda i, j: (i, j)),
        ),
        compiler_params=pltpu.CompilerParams(
            dimension_semantics=("parallel", "parallel"),
            vmem_limit_bytes=vmem_limit,
        ),
        cost_estimate=cost,
    )(x_mxu, w_k, b2, x2)

    return out2.reshape(B, S, D)


if __name__ == "__main__":
    key = jax.random.PRNGKey(0)
    kx, kw, kb, kx2 = jax.random.split(key, 4)

    B, S, D = 2, 8, 128
    x = jax.random.normal(kx, (B, S, D), dtype=jnp.float32)
    # Deterministic "Linear" parameters; torch stores weight as (D_out, D_in).
    w = jax.random.normal(kw, (D, D), dtype=jnp.float32) * 0.02
    b = jax.random.normal(kb, (D,), dtype=jnp.float32) * 0.02
    # Transpose ONCE at "init" time (pre-transposed weight) -> (D_in, D_out).
    w_t = jnp.asarray(w.T)

    # Pure-JAX reference: fn(x) + x with fn = Linear(W, b).
    ref = jnp.einsum("bsd,ed->bse", x, w) + b + x

    # Default path: bf16 MXU operands, f32 accumulate + f32 bias/residual.
    out = jax.block_until_ready(naive_residual_linear(x, w_t, b))
    assert out.shape == (B, S, D)
    assert jnp.allclose(out, ref, atol=5e-2, rtol=5e-2)

    # Full-f32 MXU operand path (tight-tolerance exactness check).
    out_f32 = jax.block_until_ready(
        naive_residual_linear(x, w_t, b, mxu_dtype=None))
    assert jnp.allclose(out_f32, ref, atol=1e-5, rtol=1e-5)

    # Ragged M (M > tile_m, M % tile_m != 0): exercises the Pallas masked
    # edge-block path that replaced the jnp.pad / out[:M] round trip.
    Br, Sr = 1, 300                       # M = 300, tile_m = 256 -> ragged tail
    xr = jax.random.normal(kx2, (Br, Sr, D), dtype=jnp.float32)
    ref_r = jnp.einsum("bsd,ed->bse", xr, w) + b + xr
    out_r = jax.block_until_ready(naive_residual_linear(xr, w_t, b))
    assert out_r.shape == (Br, Sr, D)
    assert jnp.allclose(out_r, ref_r, atol=5e-2, rtol=5e-2)

    print("KERNEL_OK")
</pallas_src>

<mosaic_0001>
module attributes {stable_mosaic.version = 11 : i64} {
  func.func @_residual_linear_kernel(%arg0: i32, %arg1: i32, %arg2: memref<16x128xbf16, #tpu.memory_space<vmem>>, %arg3: memref<128x128xbf16, #tpu.memory_space<vmem>>, %arg4: memref<1x128xf32, #tpu.memory_space<vmem>>, %arg5: memref<16x128xf32, #tpu.memory_space<vmem>>, %arg6: memref<16x128xf32, #tpu.memory_space<vmem>>) attributes {dimension_semantics = [#tpu.dimension_semantics<parallel>, #tpu.dimension_semantics<parallel>], iteration_bounds = array<i64: 1, 1>, scalar_prefetch = 0 : i64, scratch_operands = 0 : i64, tpu.core_type = #tpu.core_type<tc>, window_params = [{transform_indices = @transform_0, window_bounds = array<i64: 16, 128>}, {transform_indices = @transform_1, window_bounds = array<i64: 128, 128>}, {transform_indices = @transform_2, window_bounds = array<i64: 1, 128>}, {transform_indices = @transform_3, window_bounds = array<i64: 16, 128>}, {transform_indices = @transform_4, window_bounds = array<i64: 16, 128>}]} {
    %c0 = arith.constant 0 : index
    %c0_0 = arith.constant 0 : index
    %0 = vector.load %arg2[%c0, %c0_0] : memref<16x128xbf16, #tpu.memory_space<vmem>>, vector<16x128xbf16>
    %c0_1 = arith.constant 0 : index
    %c0_2 = arith.constant 0 : index
    %1 = vector.load %arg3[%c0_1, %c0_2] : memref<128x128xbf16, #tpu.memory_space<vmem>>, vector<128x128xbf16>
    %cst = arith.constant dense<0.000000e+00> : vector<16x128xf32>
    %2 = tpu.matmul %0, %1, %cst {dimension_numbers = #tpu.dot_dimension_numbers<[1], [0], [0], [1], [0, 0, 1, 1], [], []>} : vector<16x128xbf16>, vector<128x128xbf16>, vector<16x128xf32> -> vector<16x128xf32>
    %c0_3 = arith.constant 0 : index
    %c0_4 = arith.constant 0 : index
    %3 = vector.load %arg4[%c0_3, %c0_4] : memref<1x128xf32, #tpu.memory_space<vmem>>, vector<1x128xf32>
    %4 = vector.broadcast %3 : vector<1x128xf32> to vector<16x128xf32>
    %5 = arith.addf %2, %4 : vector<16x128xf32>
    %c0_5 = arith.constant 0 : index
    %c0_6 = arith.constant 0 : index
    %6 = vector.load %arg5[%c0_5, %c0_6] : memref<16x128xf32, #tpu.memory_space<vmem>>, vector<16x128xf32>
    %7 = arith.addf %5, %6 : vector<16x128xf32>
    %c0_7 = arith.constant 0 : index
    %c0_8 = arith.constant 0 : index
    %8 = vector.load %arg6[%c0_7, %c0_8] : memref<16x128xf32, #tpu.memory_space<vmem>>, vector<16x128xf32>
    tpu.vector_store %arg6[%c0_7, %c0_8], %7 {strides = array<i32>} : memref<16x128xf32, #tpu.memory_space<vmem>>, vector<16x128xf32>,
    return
  }
  func.func @transform_0(%arg0: i32, %arg1: i32) -> (i32, i32) {
    %c0_i32 = arith.constant 0 : i32
    %c0_i32_0 = arith.constant 0 : i32
    return %arg0, %c0_i32 : i32, i32
  }
  func.func @transform_1(%arg0: i32, %arg1: i32) -> (i32, i32) {
    %c0_i32 = arith.constant 0 : i32
    %c0_i32_0 = arith.constant 0 : i32
    return %c0_i32, %arg1 : i32, i32
  }
  func.func @transform_2(%arg0: i32, %arg1: i32) -> (i32, i32) {
    %c0_i32 = arith.constant 0 : i32
    %c0_i32_0 = arith.constant 0 : i32
    return %c0_i32, %arg1 : i32, i32
  }
  func.func @transform_3(%arg0: i32, %arg1: i32) -> (i32, i32) {
    %c0_i32 = arith.constant 0 : i32
    return %arg0, %arg1 : i32, i32
  }
  func.func @transform_4(%arg0: i32, %arg1: i32) -> (i32, i32) {
    %c0_i32 = arith.constant 0 : i32
    return %arg0, %arg1 : i32, i32
  }
}

</mosaic_0001>

<llo_original>
// kernel: tpu_custom_call.1
$region0: #{tpu_custom_call.1}
  #allocation0 [shape = 'u32[]', space=smem, size = 0x4, offset = 0x4, fixed_abs, tag = 'smem constant byte address 0x4 - core index']
  #allocation1 [shape = 'u32[144,128]{1,0:T(1,128)}', space=vmem, size = 0x12000, scoped, tag = 'internal scratch']
  %s0 = inlined_call_operand.hbm [shape: bf16[16,128], index: 0, kind: input, shape index: {}]
  %s1 = inlined_call_operand.hbm [shape: bf16[128,128], index: 1, kind: input, shape index: {}]
  %s2 = inlined_call_operand.vmem [shape: f32[1,128], index: 2, kind: input, shape index: {}]
  %s3 = inlined_call_operand.hbm [shape: f32[16,128], index: 3, kind: input, shape index: {}]
  %s4 = inlined_call_operand.hbm [shape: f32[16,128], index: 4, kind: output, shape index: {}]
  %s5 = sld [smem:[#allocation0]]
  $region38: #{tpu_custom_call.1} parent=0
    _
  %s7 = ssub.s32 1, %s5
  %s8 = scalar_select 0, %s7, %s5
  $region1: #{tpu_custom_call.1} parent=0
    #allocation2 [shape = 'u8[4096]{0}', space=vmem, size = 0x1000, scoped, tag = 'input window, operand 0, single buffered']
    #allocation3 [shape = 's32[1]{0}', space=sflag, size = 0x4, scoped, tag = 'scoped memory for tpu_custom_call.1']
    #allocation4 [shape = 's32[1]{0}', space=sflag, size = 0x4, scoped, tag = 'scoped memory for tpu_custom_call.1']
    #allocation5 [shape = 'u8[32768]{0}', space=vmem, size = 0x8000, scoped, tag = 'input window, operand 1, single buffered']
    #allocation6 [shape = 's32[1]{0}', space=sflag, size = 0x4, scoped, tag = 'scoped memory for tpu_custom_call.1']
    #allocation7 [shape = 'u8[8192]{0}', space=vmem, size = 0x2000, scoped, tag = 'input window, operand 3, single buffered']
    #allocation8 [shape = 'u8[8192]{0}', space=vmem, size = 0x2000, scoped, tag = 'output window, operand 0, single buffered']
    %9 = vsyncpa [#allocation3], 0
    %10 = vsyncpa [#allocation6], 0
    %11 = vsyncpa [#allocation4], 0
    // Predicated region
    $region2: #{tpu_custom_call.1} parent=1 // pred_check
      _
    $region3: #{tpu_custom_call.1} parent=1 // pred_check_branch
      %13 = sbr.rel (0) target = $region5
    $region4: #{tpu_custom_call.1} parent=1 // pred_region
      %s15 = ssub.s32 128, 128
      %16 = vsyncadd [#allocation3], %s15
      %s17 = sshll.u32 [#allocation2], 4
      %s18 = int_to_ptr.vmem [resolvable:$true] %s17
      %23 = dma.hbm_to_vmem [thread:$0]  %s0, 128, %s18, [#allocation3], 64, 64, 4
    $region5: #{tpu_custom_call.1} parent=1 // pred_fallthru
      _
    // Predicated region
    $region6: #{tpu_custom_call.1} parent=1 // pred_check
      _
    $region7: #{tpu_custom_call.1} parent=1 // pred_check_branch
      %25 = sbr.rel (0) target = $region9
    $region8: #{tpu_custom_call.1} parent=1 // pred_region
      %s27 = ssub.s32 1024, 1024
      %28 = vsyncadd [#allocation6], %s27
      %s29 = sshll.u32 [#allocation5], 4
      %s30 = int_to_ptr.vmem [resolvable:$true] %s29
      %35 = dma.hbm_to_vmem [thread:$0]  %s1, 1024, %s30, [#allocation6], 64, 64, 4
    $region9: #{tpu_custom_call.1} parent=1 // pred_fallthru
      _
    // Predicated region
    $region10: #{tpu_custom_call.1} parent=1 // pred_check
      _
    $region11: #{tpu_custom_call.1} parent=1 // pred_check_branch
      %37 = sbr.rel (0) target = $region13
    $region12: #{tpu_custom_call.1} parent=1 // pred_region
      _
    $region13: #{tpu_custom_call.1} parent=1 // pred_fallthru
      _
    // Predicated region
    $region14: #{tpu_custom_call.1} parent=1 // pred_check
      _
    $region15: #{tpu_custom_call.1} parent=1 // pred_check_branch
      %39 = sbr.rel (0) target = $region17
    $region16: #{tpu_custom_call.1} parent=1 // pred_region
      %s41 = ssub.s32 256, 256
      %42 = vsyncadd [#allocation6], %s41
      %s43 = sshll.u32 [#allocation7], 4
      %s44 = int_to_ptr.vmem [resolvable:$true] %s43
      %49 = dma.hbm_to_vmem [thread:$0]  %s3, 256, %s44, [#allocation6], 128, 128, 8
    $region17: #{tpu_custom_call.1} parent=1 // pred_fallthru
      _
    // Predicated region
    $region18: #{tpu_custom_call.1} parent=1 // pred_check
      _
    $region19: #{tpu_custom_call.1} parent=1 // pred_check_branch
      %51 = sbr.rel (0) target = $region21
    $region20: #{tpu_custom_call.1} parent=1 // pred_region
      %52 = dma.done [#allocation3], 128
    $region21: #{tpu_custom_call.1} parent=1 // pred_fallthru
      _
    // Predicated region
    $region22: #{tpu_custom_call.1} parent=1 // pred_check
      _
    $region23: #{tpu_custom_call.1} parent=1 // pred_check_branch
      %54 = sbr.rel (0) target = $region25
    $region24: #{tpu_custom_call.1} parent=1 // pred_region
      %55 = dma.done [#allocation6], 1024
    $region25: #{tpu_custom_call.1} parent=1 // pred_fallthru
      _
    // Predicated region
    $region26: #{tpu_custom_call.1} parent=1 // pred_check
      _
    $region27: #{tpu_custom_call.1} parent=1 // pred_check_branch
      %57 = sbr.rel (0) target = $region29
    $region28: #{tpu_custom_call.1} parent=1 // pred_region
      %58 = dma.done [#allocation6], 256
    $region29: #{tpu_custom_call.1} parent=1 // pred_fallthru
      _
    %v60 = vld [vmem:[#allocation2] sm:$0xf]
    %v61 = vld [vmem:[#allocation2 + $0x4] sm:$0xf]
    %v62 = vld [vmem:[#allocation5] sm:$0xf]
    %v63 = vld [vmem:[#allocation5 + $0x4] sm:$0xf]
    %v64 = vld [vmem:[#allocation5 + $0x8] sm:$0xf]
    %v65 = vld [vmem:[#allocation5 + $0xc] sm:$0xf]
    %v66 = vld [vmem:[#allocation5 + $0x10] sm:$0xf]
    %v67 = vld [vmem:[#allocation5 + $0x14] sm:$0xf]
    %v68 = vld [vmem:[#allocation5 + $0x18] sm:$0xf]
    %v69 = vld [vmem:[#allocation5 + $0x1c] sm:$0xf]
    %v70 = vld [vmem:[#allocation5 + $0x20] sm:$0xf]
    %v71 = vld [vmem:[#allocation5 + $0x24] sm:$0xf]
    %v72 = vld [vmem:[#allocation5 + $0x28] sm:$0xf]
    %v73 = vld [vmem:[#allocation5 + $0x2c] sm:$0xf]
    %v74 = vld [vmem:[#allocation5 + $0x30] sm:$0xf]
    %v75 = vld [vmem:[#allocation5 + $0x34] sm:$0xf]
    %v76 = vld [vmem:[#allocation5 + $0x38] sm:$0xf]
    %v77 = vld [vmem:[#allocation5 + $0x3c] sm:$0xf]
    %v78 = vld [vmem:[%s2] sm:$0x1]
    %v80 = vlaneseq
    %v81 = vshrl.u32 %v80, 7
    %v82 = vsub.s32 0, %v81
    %v83 = vrot.slane %v78, %v82
    %v87 = vunpack.c.l.b16 %v60
    %v88 = vunpack.c.l.b16 %v61
    %v89 = vpack.c.b16 %v88, %v87
    %v107 = vunpack.c.l.b16 %v62
    %v108 = vunpack.c.l.b16 %v63
    %v109 = vunpack.c.l.b16 %v64
    %v110 = vunpack.c.l.b16 %v65
    %v111 = vunpack.c.l.b16 %v66
    %v112 = vunpack.c.l.b16 %v67
    %v113 = vunpack.c.l.b16 %v68
    %v114 = vunpack.c.l.b16 %v69
    %v115 = vunpack.c.l.b16 %v70
    %v116 = vunpack.c.l.b16 %v71
    %v117 = vunpack.c.l.b16 %v72
    %v118 = vunpack.c.l.b16 %v73
    %v119 = vunpack.c.l.b16 %v74
    %v120 = vunpack.c.l.b16 %v75
    %v121 = vunpack.c.l.b16 %v76
    %v122 = vunpack.c.l.b16 %v77
    %v123 = vpack.c.b16 %v108, %v107
    %v124 = vpack.c.b16 %v110, %v109
    %v125 = vpack.c.b16 %v112, %v111
    %v126 = vpack.c.b16 %v114, %v113
    %v127 = vpack.c.b16 %v116, %v115
    %v128 = vpack.c.b16 %v118, %v117
    %v129 = vpack.c.b16 %v120, %v119
    %v130 = vpack.c.b16 %v122, %v121
    %139 = vmatprep.subr.bf16.mxu0 0
    %140 = vmatpush1.bf16.msra.mxu0 %v123
    %141 = vmatprep.subr.bf16.mxu0 0
    %142 = vmatpush1.bf16.msra.mxu0 %v124
    %143 = vmatprep.subr.bf16.mxu0 0
    %144 = vmatpush1.bf16.msra.mxu0 %v125
    %145 = vmatprep.subr.bf16.mxu0 0
    %146 = vmatpush1.bf16.msra.mxu0 %v126
    %147 = vmatprep.subr.bf16.mxu0 0
    %148 = vmatpush1.bf16.msra.mxu0 %v127
    %149 = vmatprep.subr.bf16.mxu0 0
    %150 = vmatpush1.bf16.msra.mxu0 %v128
    %151 = vmatprep.subr.bf16.mxu0 0
    %152 = vmatpush1.bf16.msra.mxu0 %v129
    %153 = vmatprep.subr.bf16.mxu0 0
    %154 = vmatpush1.bf16.msra.mxu0 %v130
    %155 = vmatprep.subr.bf16.mxu0 0
    %156 = vmatpush1.bf16.msra.mxu0 0
    %157 = vmatprep.subr.bf16.mxu0 0
    %158 = vmatpush1.bf16.msra.mxu0 0
    %159 = vmatprep.subr.bf16.mxu0 0
    %160 = vmatpush1.bf16.msra.mxu0 0
    %161 = vmatprep.subr.bf16.mxu0 0
    %162 = vmatpush1.bf16.msra.mxu0 0
    %163 = vmatprep.subr.bf16.mxu0 0
    %164 = vmatpush1.bf16.msra.mxu0 0
    %165 = vmatprep.subr.bf16.mxu0 0
    %166 = vmatpush1.bf16.msra.mxu0 0
    %167 = vmatprep.subr.bf16.mxu0 0
    %168 = vmatpush1.bf16.msra.mxu0 0
    %169 = vmatprep.subr.bf16.mxu0 0
    %170 = vmatpush1.bf16.msra.mxu0 0
    %171 = vmatprep.mubr.bf16.mxu0 0
    %172 = vmatmul.mubr.bf16.gmra.mrb[0].mxu0 %v89
    %v173 = vpop.f32.mrb[0].mxu0
    %v174 = vadd.f32 %v83, %v173
    %v175 = vpop.f32.mrb[0].mxu0
    %v176 = vpop.f32.mrb[0].mxu0
    %v177 = vadd.f32 %v83, %v176
    %v178 = vpop.f32.mrb[0].mxu0
    %179 = vdwg.mxu0
    %v180 = vld [vmem:[#allocation7] sm:$0xff]
    %v181 = vld [vmem:[#allocation7 + $0x8] sm:$0xff]
    %v182 = vadd.f32 %v174, %v180
    %v183 = vadd.f32 %v177, %v181
    %184 = vst [vmem:[#allocation8] sm:$0xff] %v182
    %185 = vst [vmem:[#allocation8 + $0x8] sm:$0xff] %v183
    // Predicated region
    $region30: #{tpu_custom_call.1} parent=1 // pred_check
      _
    $region31: #{tpu_custom_call.1} parent=1 // pred_check_branch
      %187 = sbr.rel (0) target = $region33
    $region32: #{tpu_custom_call.1} parent=1 // pred_region
      %s189 = ssub.s32 256, 256
      %190 = vsyncadd [#allocation4], %s189
      %s191 = sshll.u32 [#allocation8], 4
      %s192 = int_to_ptr.vmem [resolvable:$true] %s191
      %197 = dma.vmem_to_hbm [thread:$0]  %s192, 256, %s4, [#allocation4], 128, 128, 8
    $region33: #{tpu_custom_call.1} parent=1 // pred_fallthru
      _
    // Predicated region
    $region34: #{tpu_custom_call.1} parent=1 // pred_check
      _
    $region35: #{tpu_custom_call.1} parent=1 // pred_check_branch
      %199 = sbr.rel (0) target = $region37
    $region36: #{tpu_custom_call.1} parent=1 // pred_region
      %200 = dma.done [#allocation4], 256
    $region37: #{tpu_custom_call.1} parent=1 // pred_fallthru
      _
    %201 = vsyncpa [#allocation3], 1
    %202 = vsyncpa [#allocation6], 1
    %203 = vsyncpa [#allocation4], 1

</llo_original>
